<compile_context>
chip_gen: v5e
topology: v5e:2x2
jax: 0.10.0
libtpu: 0.0.40
codegen_flags: <defaults>
</compile_context>

<pallas_src>
import math

import jax
import jax.numpy as jnp
from jax import lax
from jax.experimental import pallas as pl
from jax.experimental.pallas import tpu as pltpu

_LANES = 1024          # lane-dense last dim (multiple of 128)
_MAX_BLOCK_ROWS = 512  # 512x1024 f32 = 2 MiB per block


def _noise_kernel(seed_ref, mag_ref, x_ref, o_ref):
    """o = x + magnitude * N(0,1), noise generated per-element in-kernel."""
    bm, bn = x_ref.shape

    # ---- unique per-element counter across the whole (padded) tensor --------
    row = lax.broadcasted_iota(jnp.int32, (bm, bn), 0)
    col = lax.broadcasted_iota(jnp.int32, (bm, bn), 1)
    base = pl.program_id(0) * (bm * bn)
    ctr = (base + row * bn + col).astype(jnp.uint32)

    # ---- counter-based PRNG: murmur3 finalizer of (counter ^ seed key) ------
    key = seed_ref[0].astype(jnp.uint32)
    h = ctr ^ key
    h = h ^ (h >> 16)
    h = h * jnp.uint32(0x85EBCA6B)
    h = h ^ (h >> 13)
    h = h * jnp.uint32(0xC2B2AE35)
    h = h ^ (h >> 16)

    # ---- uniform in (0, 1) from the top 23 bits ------------------------------
    v = (h >> 9).astype(jnp.int32)                                 # [0, 2^23)
    u = (v.astype(jnp.float32) + 0.5) * jnp.float32(1.0 / (1 << 23))
    t = 2.0 * u - 1.0                                              # (-1, 1)

    # ---- standard normal via inverse CDF: z = sqrt(2) * erfinv(t) -----------
    # Giles' single-precision erfinv approximation: log + sqrt only, no trig.
    w = -jnp.log((1.0 - t) * (1.0 + t))                            # w >= 0

    wc = w - 2.5                                                   # w < 5 branch
    pc = jnp.float32(2.81022636e-08)
    pc = 3.43273939e-07 + pc * wc
    pc = -3.5233877e-06 + pc * wc
    pc = -4.39150654e-06 + pc * wc
    pc = 0.00021858087 + pc * wc
    pc = -0.00125372503 + pc * wc
    pc = -0.00417768164 + pc * wc
    pc = 0.246640727 + pc * wc
    pc = 1.50140941 + pc * wc

    wt = jnp.sqrt(w) - 3.0                                         # w >= 5 branch
    pt = jnp.float32(-0.000200214257)
    pt = 0.000100950558 + pt * wt
    pt = 0.00134934322 + pt * wt
    pt = -0.00367342844 + pt * wt
    pt = 0.00573950773 + pt * wt
    pt = -0.0076224613 + pt * wt
    pt = 0.00943887047 + pt * wt
    pt = 1.00167406 + pt * wt
    pt = 2.83297682 + pt * wt

    p = jnp.where(w < 5.0, pc, pt)
    z = jnp.float32(math.sqrt(2.0)) * p * t                        # ~N(0, 1)

    # ---- fused add, compute in f32, single final cast ------------------------
    mag = mag_ref[0]
    o_ref[...] = (x_ref[...].astype(jnp.float32) + mag * z).astype(o_ref.dtype)


def _round_up(x, m):
    return ((x + m - 1) // m) * m


def _host_mix32(v):
    """murmur3 finalizer on a Python int (host-side seed hashing)."""
    v &= 0xFFFFFFFF
    v ^= v >> 16
    v = (v * 0x85EBCA6B) & 0xFFFFFFFF
    v ^= v >> 13
    v = (v * 0xC2B2AE35) & 0xFFFFFFFF
    v ^= v >> 16
    return v


def noise_layer(x, *, magnitude=0.0, loss_type="lsgan", seed=0):
    """Pallas implementation of NoiseLayer.forward (any input shape, e.g. NCHW)."""
    if loss_type != "lsgan":
        return x                                    # passthrough branch

    # Fast path: the module initializes magnitude to 0, making the lsgan
    # branch an exact identity -- skip the kernel (and all HBM traffic).
    if isinstance(magnitude, (int, float)) and magnitude == 0:
        return x

    n = x.size
    if n == 0:
        return x

    # Lane-dense tiling: flatten to (rows, 1024), tile rows in <=512 chunks.
    rows_needed = pl.cdiv(n, _LANES)
    rows_min = _round_up(max(rows_needed, 1), 8)
    block_rows = min(_MAX_BLOCK_ROWS, rows_min)
    rows = _round_up(rows_min, block_rows)
    padded_n = rows * _LANES
    grid = rows // block_rows

    x_flat = x.reshape(-1)
    if padded_n != n:
        x_flat = jnp.pad(x_flat, (0, padded_n - n))
    x2 = x_flat.reshape(rows, _LANES)

    # Well-mixed 32-bit key derived from the integer seed (host side).
    key32 = _host_mix32((int(seed) ^ 0x9E3779B9) & 0xFFFFFFFF)
    if key32 >= (1 << 31):
        key32 -= 1 << 32
    seed_arr = jnp.array([key32], dtype=jnp.int32)
    mag_arr = jnp.asarray(magnitude, dtype=jnp.float32).reshape(1)

    out2 = pl.pallas_call(
        _noise_kernel,
        out_shape=jax.ShapeDtypeStruct(x2.shape, x2.dtype),
        grid=(grid,),
        in_specs=[
            pl.BlockSpec(memory_space=pltpu.MemorySpace.SMEM),      # seed key
            pl.BlockSpec(memory_space=pltpu.MemorySpace.SMEM),      # magnitude
            pl.BlockSpec((block_rows, _LANES), lambda i: (i, 0)),   # x tile
        ],
        out_specs=pl.BlockSpec((block_rows, _LANES), lambda i: (i, 0)),
        compiler_params=pltpu.CompilerParams(
            dimension_semantics=("parallel",),
        ),
    )(seed_arr, mag_arr, x2)

    out = out2.reshape(-1)
    if padded_n != n:
        out = out[:n]
    return out.reshape(x.shape)


if __name__ == "__main__":
    key = jax.random.PRNGKey(0)
    x = jax.random.normal(key, (2, 4, 16, 16), dtype=jnp.float32)

    # Default config (magnitude=0, as in NoiseLayer.__init__): exact identity,
    # no kernel launched at all.
    y0 = jax.block_until_ready(noise_layer(x, magnitude=0.0, loss_type="lsgan", seed=123))
    assert y0.shape == x.shape and y0.dtype == x.dtype
    assert jnp.array_equal(y0, x), "magnitude=0 path must be identity"

    # Nonzero magnitude: exercises the Pallas kernel. x + 0.1 * N(0,1).
    y1 = jax.block_until_ready(noise_layer(x, magnitude=0.1, loss_type="lsgan", seed=123))
    assert y1.shape == x.shape and y1.dtype == x.dtype
    assert bool(jnp.all(jnp.isfinite(y1)))
    assert not jnp.allclose(y1, x)
    d = (y1 - x) / 0.1
    m, s = float(jnp.mean(d)), float(jnp.std(d))
    assert abs(m) < 0.1 and 0.8 < s < 1.2, f"noise stats off: mean={m}, std={s}"

    # Same seed -> same noise (deterministic).
    y1b = jax.block_until_ready(noise_layer(x, magnitude=0.1, loss_type="lsgan", seed=123))
    assert jnp.array_equal(y1, y1b)

    # Non-lsgan path: passthrough.
    y2 = jax.block_until_ready(noise_layer(x, magnitude=0.1, loss_type="wgan"))
    assert jnp.array_equal(y2, x)

    print("KERNEL_OK")
</pallas_src>

<mosaic_0001>
module attributes {stable_mosaic.version = 11 : i64} {
  func.func @_noise_kernel(%arg0: i32, %arg1: memref<1xi32, #tpu.memory_space<smem>>, %arg2: memref<1xf32, #tpu.memory_space<smem>>, %arg3: memref<8x1024xf32, #tpu.memory_space<vmem>>, %arg4: memref<8x1024xf32, #tpu.memory_space<vmem>>) attributes {dimension_semantics = [#tpu.dimension_semantics<parallel>], iteration_bounds = array<i64: 1>, scalar_prefetch = 0 : i64, scratch_operands = 0 : i64, tpu.core_type = #tpu.core_type<tc>, window_params = [{transform_indices = @transform_0, window_bounds = array<i64: 1>}, {transform_indices = @transform_1, window_bounds = array<i64: 1>}, {transform_indices = @transform_2, window_bounds = array<i64: 8, 1024>}, {transform_indices = @transform_3, window_bounds = array<i64: 8, 1024>}]} {
    %0 = tpu.iota {dimensions = array<i32: 0>} : vector<8x1024xi32>
    %1 = tpu.iota {dimensions = array<i32: 1>} : vector<8x1024xi32>
    %c8192_i32 = arith.constant 8192 : i32
    %2 = arith.muli %arg0, %c8192_i32 : i32
    %c1024_i32 = arith.constant 1024 : i32
    %3 = vector.broadcast %c1024_i32 : i32 to vector<8x1024xi32>
    %4 = arith.muli %0, %3 : vector<8x1024xi32>
    %5 = vector.broadcast %2 : i32 to vector<8x1024xi32>
    %6 = arith.addi %5, %4 : vector<8x1024xi32>
    %7 = arith.addi %6, %1 : vector<8x1024xi32>
    %c0 = arith.constant 0 : index
    %8 = memref.load %arg1[%c0] : memref<1xi32, #tpu.memory_space<smem>>
    %9 = vector.broadcast %8 : i32 to vector<8x1024xi32>
    %10 = arith.xori %7, %9 : vector<8x1024xi32>
    %c16_i32 = arith.constant 16 : i32
    %11 = vector.broadcast %c16_i32 : i32 to vector<8x1024xi32>
    %12 = arith.shrui %10, %11 : vector<8x1024xi32>
    %13 = arith.xori %10, %12 : vector<8x1024xi32>
    %c-2048144789_i32 = arith.constant -2048144789 : i32
    %14 = vector.broadcast %c-2048144789_i32 : i32 to vector<8x1024xi32>
    %15 = arith.muli %13, %14 : vector<8x1024xi32>
    %c13_i32 = arith.constant 13 : i32
    %16 = vector.broadcast %c13_i32 : i32 to vector<8x1024xi32>
    %17 = arith.shrui %15, %16 : vector<8x1024xi32>
    %18 = arith.xori %15, %17 : vector<8x1024xi32>
    %c-1028477387_i32 = arith.constant -1028477387 : i32
    %19 = vector.broadcast %c-1028477387_i32 : i32 to vector<8x1024xi32>
    %20 = arith.muli %18, %19 : vector<8x1024xi32>
    %c16_i32_0 = arith.constant 16 : i32
    %21 = vector.broadcast %c16_i32_0 : i32 to vector<8x1024xi32>
    %22 = arith.shrui %20, %21 : vector<8x1024xi32>
    %23 = arith.xori %20, %22 : vector<8x1024xi32>
    %c9_i32 = arith.constant 9 : i32
    %24 = vector.broadcast %c9_i32 : i32 to vector<8x1024xi32>
    %25 = arith.shrui %23, %24 : vector<8x1024xi32>
    %26 = arith.sitofp %25 : vector<8x1024xi32> to vector<8x1024xf32>
    %cst = arith.constant 5.000000e-01 : f32
    %27 = vector.broadcast %cst : f32 to vector<8x1024xf32>
    %28 = arith.addf %26, %27 : vector<8x1024xf32>
    %cst_1 = arith.constant 1.1920929E-7 : f32
    %29 = vector.broadcast %cst_1 : f32 to vector<8x1024xf32>
    %30 = arith.mulf %28, %29 : vector<8x1024xf32>
    %cst_2 = arith.constant 2.000000e+00 : f32
    %31 = vector.broadcast %cst_2 : f32 to vector<8x1024xf32>
    %32 = arith.mulf %31, %30 : vector<8x1024xf32>
    %cst_3 = arith.constant 1.000000e+00 : f32
    %33 = vector.broadcast %cst_3 : f32 to vector<8x1024xf32>
    %34 = arith.subf %32, %33 : vector<8x1024xf32>
    %cst_4 = arith.constant 1.000000e+00 : f32
    %35 = vector.broadcast %cst_4 : f32 to vector<8x1024xf32>
    %36 = arith.subf %35, %34 : vector<8x1024xf32>
    %cst_5 = arith.constant 1.000000e+00 : f32
    %37 = vector.broadcast %cst_5 : f32 to vector<8x1024xf32>
    %38 = arith.addf %37, %34 : vector<8x1024xf32>
    %39 = arith.mulf %36, %38 : vector<8x1024xf32>
    %40 = math.log %39 : vector<8x1024xf32>
    %cst_6 = arith.constant 0.000000e+00 : f32
    %41 = vector.broadcast %cst_6 : f32 to vector<8x1024xf32>
    %42 = arith.subf %41, %40 : vector<8x1024xf32>
    %cst_7 = arith.constant 2.500000e+00 : f32
    %43 = vector.broadcast %cst_7 : f32 to vector<8x1024xf32>
    %44 = arith.subf %42, %43 : vector<8x1024xf32>
    %cst_8 = arith.constant 2.81022636E-8 : f32
    %45 = vector.broadcast %cst_8 : f32 to vector<8x1024xf32>
    %46 = arith.mulf %45, %44 : vector<8x1024xf32>
    %cst_9 = arith.constant 3.43273939E-7 : f32
    %47 = vector.broadcast %cst_9 : f32 to vector<8x1024xf32>
    %48 = arith.addf %47, %46 : vector<8x1024xf32>
    %49 = arith.mulf %48, %44 : vector<8x1024xf32>
    %cst_10 = arith.constant -3.5233877E-6 : f32
    %50 = vector.broadcast %cst_10 : f32 to vector<8x1024xf32>
    %51 = arith.addf %50, %49 : vector<8x1024xf32>
    %52 = arith.mulf %51, %44 : vector<8x1024xf32>
    %cst_11 = arith.constant -4.39150654E-6 : f32
    %53 = vector.broadcast %cst_11 : f32 to vector<8x1024xf32>
    %54 = arith.addf %53, %52 : vector<8x1024xf32>
    %55 = arith.mulf %54, %44 : vector<8x1024xf32>
    %cst_12 = arith.constant 2.1858087E-4 : f32
    %56 = vector.broadcast %cst_12 : f32 to vector<8x1024xf32>
    %57 = arith.addf %56, %55 : vector<8x1024xf32>
    %58 = arith.mulf %57, %44 : vector<8x1024xf32>
    %cst_13 = arith.constant -0.00125372503 : f32
    %59 = vector.broadcast %cst_13 : f32 to vector<8x1024xf32>
    %60 = arith.addf %59, %58 : vector<8x1024xf32>
    %61 = arith.mulf %60, %44 : vector<8x1024xf32>
    %cst_14 = arith.constant -0.00417768164 : f32
    %62 = vector.broadcast %cst_14 : f32 to vector<8x1024xf32>
    %63 = arith.addf %62, %61 : vector<8x1024xf32>
    %64 = arith.mulf %63, %44 : vector<8x1024xf32>
    %cst_15 = arith.constant 0.246640727 : f32
    %65 = vector.broadcast %cst_15 : f32 to vector<8x1024xf32>
    %66 = arith.addf %65, %64 : vector<8x1024xf32>
    %67 = arith.mulf %66, %44 : vector<8x1024xf32>
    %cst_16 = arith.constant 1.50140941 : f32
    %68 = vector.broadcast %cst_16 : f32 to vector<8x1024xf32>
    %69 = arith.addf %68, %67 : vector<8x1024xf32>
    %70 = math.sqrt %42 : vector<8x1024xf32>
    %cst_17 = arith.constant 3.000000e+00 : f32
    %71 = vector.broadcast %cst_17 : f32 to vector<8x1024xf32>
    %72 = arith.subf %70, %71 : vector<8x1024xf32>
    %cst_18 = arith.constant -2.00214257E-4 : f32
    %73 = vector.broadcast %cst_18 : f32 to vector<8x1024xf32>
    %74 = arith.mulf %73, %72 : vector<8x1024xf32>
    %cst_19 = arith.constant 1.00950558E-4 : f32
    %75 = vector.broadcast %cst_19 : f32 to vector<8x1024xf32>
    %76 = arith.addf %75, %74 : vector<8x1024xf32>
    %77 = arith.mulf %76, %72 : vector<8x1024xf32>
    %cst_20 = arith.constant 0.00134934322 : f32
    %78 = vector.broadcast %cst_20 : f32 to vector<8x1024xf32>
    %79 = arith.addf %78, %77 : vector<8x1024xf32>
    %80 = arith.mulf %79, %72 : vector<8x1024xf32>
    %cst_21 = arith.constant -0.00367342844 : f32
    %81 = vector.broadcast %cst_21 : f32 to vector<8x1024xf32>
    %82 = arith.addf %81, %80 : vector<8x1024xf32>
    %83 = arith.mulf %82, %72 : vector<8x1024xf32>
    %cst_22 = arith.constant 0.00573950773 : f32
    %84 = vector.broadcast %cst_22 : f32 to vector<8x1024xf32>
    %85 = arith.addf %84, %83 : vector<8x1024xf32>
    %86 = arith.mulf %85, %72 : vector<8x1024xf32>
    %cst_23 = arith.constant -0.0076224613 : f32
    %87 = vector.broadcast %cst_23 : f32 to vector<8x1024xf32>
    %88 = arith.addf %87, %86 : vector<8x1024xf32>
    %89 = arith.mulf %88, %72 : vector<8x1024xf32>
    %cst_24 = arith.constant 0.00943887047 : f32
    %90 = vector.broadcast %cst_24 : f32 to vector<8x1024xf32>
    %91 = arith.addf %90, %89 : vector<8x1024xf32>
    %92 = arith.mulf %91, %72 : vector<8x1024xf32>
    %cst_25 = arith.constant 1.00167406 : f32
    %93 = vector.broadcast %cst_25 : f32 to vector<8x1024xf32>
    %94 = arith.addf %93, %92 : vector<8x1024xf32>
    %95 = arith.mulf %94, %72 : vector<8x1024xf32>
    %cst_26 = arith.constant 2.83297682 : f32
    %96 = vector.broadcast %cst_26 : f32 to vector<8x1024xf32>
    %97 = arith.addf %96, %95 : vector<8x1024xf32>
    %cst_27 = arith.constant 5.000000e+00 : f32
    %98 = vector.broadcast %cst_27 : f32 to vector<8x1024xf32>
    %99 = arith.cmpf olt, %42, %98 : vector<8x1024xf32>
    %100 = arith.select %99, %69, %97 : vector<8x1024xi1>, vector<8x1024xf32>
    %cst_28 = arith.constant 1.41421354 : f32
    %101 = vector.broadcast %cst_28 : f32 to vector<8x1024xf32>
    %102 = arith.mulf %101, %100 : vector<8x1024xf32>
    %103 = arith.mulf %102, %34 : vector<8x1024xf32>
    %c0_29 = arith.constant 0 : index
    %104 = memref.load %arg2[%c0_29] : memref<1xf32, #tpu.memory_space<smem>>
    %c0_30 = arith.constant 0 : index
    %c0_31 = arith.constant 0 : index
    %105 = vector.load %arg3[%c0_30, %c0_31] : memref<8x1024xf32, #tpu.memory_space<vmem>>, vector<8x1024xf32>
    %106 = vector.broadcast %104 : f32 to vector<8x1024xf32>
    %107 = arith.mulf %106, %103 : vector<8x1024xf32>
    %108 = arith.addf %105, %107 : vector<8x1024xf32>
    %c0_32 = arith.constant 0 : index
    %c0_33 = arith.constant 0 : index
    %109 = vector.load %arg4[%c0_32, %c0_33] : memref<8x1024xf32, #tpu.memory_space<vmem>>, vector<8x1024xf32>
    tpu.vector_store %arg4[%c0_32, %c0_33], %108 {strides = array<i32>} : memref<8x1024xf32, #tpu.memory_space<vmem>>, vector<8x1024xf32>,
    return
  }
  func.func @transform_0(%arg0: i32) -> i32 {
    %c0_i32 = arith.constant 0 : i32
    %c0_i32_0 = arith.constant 0 : i32
    return %c0_i32 : i32
  }
  func.func @transform_1(%arg0: i32) -> i32 {
    %c0_i32 = arith.constant 0 : i32
    %c0_i32_0 = arith.constant 0 : i32
    return %c0_i32 : i32
  }
  func.func @transform_2(%arg0: i32) -> (i32, i32) {
    %c0_i32 = arith.constant 0 : i32
    %c0_i32_0 = arith.constant 0 : i32
    return %arg0, %c0_i32 : i32, i32
  }
  func.func @transform_3(%arg0: i32) -> (i32, i32) {
    %c0_i32 = arith.constant 0 : i32
    %c0_i32_0 = arith.constant 0 : i32
    return %arg0, %c0_i32 : i32, i32
  }
}

</mosaic_0001>

<llo_original>
// kernel: tpu_custom_call.1
$region0: #{tpu_custom_call.1}
  #allocation0 [shape = 'u32[]', space=smem, size = 0x4, offset = 0x4, fixed_abs, tag = 'smem constant byte address 0x4 - core index']
  #allocation1 [shape = 'u32[72,128]{1,0:T(1,128)}', space=vmem, size = 0x9000, scoped, tag = 'internal scratch']
  #allocation2 [shape = 's32[1]{0:T(128)S(6)}', space=smem, size = 0x200, scoped, tag = 'scoped memory for tpu_custom_call.1']
  #allocation3 [shape = 'f32[1]{0:T(128)S(6)}', space=smem, size = 0x200, scoped, tag = 'scoped memory for tpu_custom_call.1']
  %s0 = inlined_call_operand.<no memory space> [shape: s32[1], index: 0, kind: input, shape index: {}]
  %s1 = inlined_call_operand.<no memory space> [shape: f32[1], index: 1, kind: input, shape index: {}]
  %s2 = inlined_call_operand.hbm [shape: f32[8,1024], index: 2, kind: input, shape index: {}]
  %s3 = inlined_call_operand.hbm [shape: f32[8,1024], index: 3, kind: output, shape index: {}]
  %s4 = sld [smem:[#allocation0]]
  $region26: #{tpu_custom_call.1} parent=0
    _
  %s6 = ssub.s32 1, %s4
  %s7 = scalar_select 0, %s6, %s4
  %8 = sst [smem:[#allocation2]] %s0
  %9 = sst [smem:[#allocation3]] %s1
  $region1: #{tpu_custom_call.1} parent=0
    #allocation4 [shape = 'u8[32768]{0}', space=vmem, size = 0x8000, scoped, tag = 'input window, operand 2, single buffered']
    #allocation5 [shape = 's32[1]{0}', space=sflag, size = 0x4, scoped, tag = 'scoped memory for tpu_custom_call.1']
    #allocation6 [shape = 's32[1]{0}', space=sflag, size = 0x4, scoped, tag = 'scoped memory for tpu_custom_call.1']
    #allocation7 [shape = 'u8[32768]{0}', space=vmem, size = 0x8000, scoped, tag = 'output window, operand 0, single buffered']
    %10 = vsyncpa [#allocation5], 0
    %11 = vsyncpa [#allocation6], 0
    // Predicated region
    $region2: #{tpu_custom_call.1} parent=1 // pred_check
      _
    $region3: #{tpu_custom_call.1} parent=1 // pred_check_branch
      %13 = sbr.rel (0) target = $region5
    $region4: #{tpu_custom_call.1} parent=1 // pred_region
      _
    $region5: #{tpu_custom_call.1} parent=1 // pred_fallthru
      _
    // Predicated region
    $region6: #{tpu_custom_call.1} parent=1 // pred_check
      _
    $region7: #{tpu_custom_call.1} parent=1 // pred_check_branch
      %15 = sbr.rel (0) target = $region9
    $region8: #{tpu_custom_call.1} parent=1 // pred_region
      _
    $region9: #{tpu_custom_call.1} parent=1 // pred_fallthru
      _
    // Predicated region
    $region10: #{tpu_custom_call.1} parent=1 // pred_check
      _
    $region11: #{tpu_custom_call.1} parent=1 // pred_check_branch
      %17 = sbr.rel (0) target = $region13
    $region12: #{tpu_custom_call.1} parent=1 // pred_region
      %19 = vsyncadd [#allocation5], 0
      %s21 = sshll.u32 %s2, 4
      %s22 = int_to_ptr.hbm [resolvable:$true] %s21
      %s23 = sshll.u32 [#allocation4], 4
      %s24 = int_to_ptr.vmem [resolvable:$true] %s23
      %26 = dma.hbm_to_vmem [thread:$0]  %s22, 1024, %s24, [#allocation5]
    $region13: #{tpu_custom_call.1} parent=1 // pred_fallthru
      _
    // Predicated region
    $region14: #{tpu_custom_call.1} parent=1 // pred_check
      _
    $region15: #{tpu_custom_call.1} parent=1 // pred_check_branch
      %28 = sbr.rel (0) target = $region17
    $region16: #{tpu_custom_call.1} parent=1 // pred_region
      %30 = dma.done [#allocation5], 1024
    $region17: #{tpu_custom_call.1} parent=1 // pred_fallthru
      _
    %v31 = vlaneseq
    %v32 = vshrl.u32 %v31, 7
    %v33 = vlaneseq
    %v34 = vand.u32 %v33, 127
    %v35 = vadd.s32 %v34, 128
    %v36 = vadd.s32 %v34, 256
    %v37 = vadd.s32 %v34, 384
    %v38 = vadd.s32 %v34, 512
    %v39 = vadd.s32 %v34, 640
    %v40 = vadd.s32 %v34, 768
    %v41 = vadd.s32 %v34, 896
    %s42 = smul.u32 0, 8192
    %v43 = vmul.u32 %v32, 1024
    %v44 = vstv %s42
    %v45 = vadd.s32 %v44, %v43
    %v46 = vadd.s32 %v45, %v34
    %v47 = vadd.s32 %v45, %v35
    %v48 = vadd.s32 %v45, %v36
    %v49 = vadd.s32 %v45, %v37
    %v50 = vadd.s32 %v45, %v38
    %v51 = vadd.s32 %v45, %v39
    %v52 = vadd.s32 %v45, %v40
    %v53 = vadd.s32 %v45, %v41
    %s54 = sld [smem:[#allocation2]]
    %v55 = vstv %s54
    %v56 = vxor.u32 %v46, %v55
    %v57 = vxor.u32 %v47, %v55
    %v58 = vxor.u32 %v48, %v55
    %v59 = vxor.u32 %v49, %v55
    %v60 = vxor.u32 %v50, %v55
    %v61 = vxor.u32 %v51, %v55
    %v62 = vxor.u32 %v52, %v55
    %v63 = vxor.u32 %v53, %v55
    %v64 = vshrl.u32 %v56, 16
    %v65 = vshrl.u32 %v57, 16
    %v66 = vshrl.u32 %v58, 16
    %v67 = vshrl.u32 %v59, 16
    %v68 = vshrl.u32 %v60, 16
    %v69 = vshrl.u32 %v61, 16
    %v70 = vshrl.u32 %v62, 16
    %v71 = vshrl.u32 %v63, 16
    %v72 = vxor.u32 %v56, %v64
    %v73 = vxor.u32 %v57, %v65
    %v74 = vxor.u32 %v58, %v66
    %v75 = vxor.u32 %v59, %v67
    %v76 = vxor.u32 %v60, %v68
    %v77 = vxor.u32 %v61, %v69
    %v78 = vxor.u32 %v62, %v70
    %v79 = vxor.u32 %v63, %v71
    %v80 = vmul.u32 %v72, 2246822507
    %v81 = vmul.u32 %v73, 2246822507
    %v82 = vmul.u32 %v74, 2246822507
    %v83 = vmul.u32 %v75, 2246822507
    %v84 = vmul.u32 %v76, 2246822507
    %v85 = vmul.u32 %v77, 2246822507
    %v86 = vmul.u32 %v78, 2246822507
    %v87 = vmul.u32 %v79, 2246822507
    %v88 = vshrl.u32 %v80, 13
    %v89 = vshrl.u32 %v81, 13
    %v90 = vshrl.u32 %v82, 13
    %v91 = vshrl.u32 %v83, 13
    %v92 = vshrl.u32 %v84, 13
    %v93 = vshrl.u32 %v85, 13
    %v94 = vshrl.u32 %v86, 13
    %v95 = vshrl.u32 %v87, 13
    %v96 = vxor.u32 %v80, %v88
    %v97 = vxor.u32 %v81, %v89
    %v98 = vxor.u32 %v82, %v90
    %v99 = vxor.u32 %v83, %v91
    %v100 = vxor.u32 %v84, %v92
    %v101 = vxor.u32 %v85, %v93
    %v102 = vxor.u32 %v86, %v94
    %v103 = vxor.u32 %v87, %v95
    %v104 = vmul.u32 %v96, 3266489909
    %v105 = vmul.u32 %v97, 3266489909
    %v106 = vmul.u32 %v98, 3266489909
    %v107 = vmul.u32 %v99, 3266489909
    %v108 = vmul.u32 %v100, 3266489909
    %v109 = vmul.u32 %v101, 3266489909
    %v110 = vmul.u32 %v102, 3266489909
    %v111 = vmul.u32 %v103, 3266489909
    %v112 = vshrl.u32 %v104, 16
    %v113 = vshrl.u32 %v105, 16
    %v114 = vshrl.u32 %v106, 16
    %v115 = vshrl.u32 %v107, 16
    %v116 = vshrl.u32 %v108, 16
    %v117 = vshrl.u32 %v109, 16
    %v118 = vshrl.u32 %v110, 16
    %v119 = vshrl.u32 %v111, 16
    %v120 = vxor.u32 %v104, %v112
    %v121 = vxor.u32 %v105, %v113
    %v122 = vxor.u32 %v106, %v114
    %v123 = vxor.u32 %v107, %v115
    %v124 = vxor.u32 %v108, %v116
    %v125 = vxor.u32 %v109, %v117
    %v126 = vxor.u32 %v110, %v118
    %v127 = vxor.u32 %v111, %v119
    %v128 = vshrl.u32 %v120, 9
    %v129 = vshrl.u32 %v121, 9
    %v130 = vshrl.u32 %v122, 9
    %v131 = vshrl.u32 %v123, 9
    %v132 = vshrl.u32 %v124, 9
    %v133 = vshrl.u32 %v125, 9
    %v134 = vshrl.u32 %v126, 9
    %v135 = vshrl.u32 %v127, 9
    %v136 = vcvt.s32.f32 %v128
    %v137 = vcvt.s32.f32 %v129
    %v138 = vcvt.s32.f32 %v130
    %v139 = vcvt.s32.f32 %v131
    %v140 = vcvt.s32.f32 %v132
    %v141 = vcvt.s32.f32 %v133
    %v142 = vcvt.s32.f32 %v134
    %v143 = vcvt.s32.f32 %v135
    %v144 = vadd.f32 %v136, 0.5
    %v145 = vadd.f32 %v137, 0.5
    %v146 = vadd.f32 %v138, 0.5
    %v147 = vadd.f32 %v139, 0.5
    %v148 = vadd.f32 %v140, 0.5
    %v149 = vadd.f32 %v141, 0.5
    %v150 = vadd.f32 %v142, 0.5
    %v151 = vadd.f32 %v143, 0.5
    %v152 = vmul.f32 %v144, 1.1920929e-07
    %v153 = vmul.f32 %v145, 1.1920929e-07
    %v154 = vmul.f32 %v146, 1.1920929e-07
    %v155 = vmul.f32 %v147, 1.1920929e-07
    %v156 = vmul.f32 %v148, 1.1920929e-07
    %v157 = vmul.f32 %v149, 1.1920929e-07
    %v158 = vmul.f32 %v150, 1.1920929e-07
    %v159 = vmul.f32 %v151, 1.1920929e-07
    %v160 = vmul.f32 %v152, 2.0
    %v161 = vmul.f32 %v153, 2.0
    %v162 = vmul.f32 %v154, 2.0
    %v163 = vmul.f32 %v155, 2.0
    %v164 = vmul.f32 %v156, 2.0
    %v165 = vmul.f32 %v157, 2.0
    %v166 = vmul.f32 %v158, 2.0
    %v167 = vmul.f32 %v159, 2.0
    %v168 = vsub.f32 %v160, 1.0
    %v169 = vsub.f32 %v161, 1.0
    %v170 = vsub.f32 %v162, 1.0
    %v171 = vsub.f32 %v163, 1.0
    %v172 = vsub.f32 %v164, 1.0
    %v173 = vsub.f32 %v165, 1.0
    %v174 = vsub.f32 %v166, 1.0
    %v175 = vsub.f32 %v167, 1.0
    %v176 = vsub.f32 1.0, %v168
    %v177 = vsub.f32 1.0, %v169
    %v178 = vsub.f32 1.0, %v170
    %v179 = vsub.f32 1.0, %v171
    %v180 = vsub.f32 1.0, %v172
    %v181 = vsub.f32 1.0, %v173
    %v182 = vsub.f32 1.0, %v174
    %v183 = vsub.f32 1.0, %v175
    %v184 = vadd.f32 %v168, 1.0
    %v185 = vadd.f32 %v169, 1.0
    %v186 = vadd.f32 %v170, 1.0
    %v187 = vadd.f32 %v171, 1.0
    %v188 = vadd.f32 %v172, 1.0
    %v189 = vadd.f32 %v173, 1.0
    %v190 = vadd.f32 %v174, 1.0
    %v191 = vadd.f32 %v175, 1.0
    %v192 = vmul.f32 %v176, %v184
    %v193 = vmul.f32 %v177, %v185
    %v194 = vmul.f32 %v178, %v186
    %v195 = vmul.f32 %v179, %v187
    %v196 = vmul.f32 %v180, %v188
    %v197 = vmul.f32 %v181, %v189
    %v198 = vmul.f32 %v182, %v190
    %v199 = vmul.f32 %v183, %v191
    %v200 = vlog2.pop %v192
    %v201 = vmul.f32 %v200, 0.6931472
    %v202 = vlog2.pop %v193
    %v203 = vmul.f32 %v202, 0.6931472
    %v204 = vlog2.pop %v194
    %v205 = vmul.f32 %v204, 0.6931472
    %v206 = vlog2.pop %v195
    %v207 = vmul.f32 %v206, 0.6931472
    %v208 = vlog2.pop %v196
    %v209 = vmul.f32 %v208, 0.6931472
    %v210 = vlog2.pop %v197
    %v211 = vmul.f32 %v210, 0.6931472
    %v212 = vlog2.pop %v198
    %v213 = vmul.f32 %v212, 0.6931472
    %v214 = vlog2.pop %v199
    %v215 = vmul.f32 %v214, 0.6931472
    %v216 = vsub.f32 0.0, %v201
    %v217 = vsub.f32 0.0, %v203
    %v218 = vsub.f32 0.0, %v205
    %v219 = vsub.f32 0.0, %v207
    %v220 = vsub.f32 0.0, %v209
    %v221 = vsub.f32 0.0, %v211
    %v222 = vsub.f32 0.0, %v213
    %v223 = vsub.f32 0.0, %v215
    %v224 = vsub.f32 %v216, 2.5
    %v225 = vsub.f32 %v217, 2.5
    %v226 = vsub.f32 %v218, 2.5
    %v227 = vsub.f32 %v219, 2.5
    %v228 = vsub.f32 %v220, 2.5
    %v229 = vsub.f32 %v221, 2.5
    %v230 = vsub.f32 %v222, 2.5
    %v231 = vsub.f32 %v223, 2.5
    %v232 = vmul.f32 %v224, 2.8102264e-08
    %v233 = vmul.f32 %v225, 2.8102264e-08
    %v234 = vmul.f32 %v226, 2.8102264e-08
    %v235 = vmul.f32 %v227, 2.8102264e-08
    %v236 = vmul.f32 %v228, 2.8102264e-08
    %v237 = vmul.f32 %v229, 2.8102264e-08
    %v238 = vmul.f32 %v230, 2.8102264e-08
    %v239 = vmul.f32 %v231, 2.8102264e-08
    %v240 = vadd.f32 %v232, 3.4327394e-07
    %v241 = vadd.f32 %v233, 3.4327394e-07
    %v242 = vadd.f32 %v234, 3.4327394e-07
    %v243 = vadd.f32 %v235, 3.4327394e-07
    %v244 = vadd.f32 %v236, 3.4327394e-07
    %v245 = vadd.f32 %v237, 3.4327394e-07
    %v246 = vadd.f32 %v238, 3.4327394e-07
    %v247 = vadd.f32 %v239, 3.4327394e-07
    %v248 = vmul.f32 %v240, %v224
    %v249 = vmul.f32 %v241, %v225
    %v250 = vmul.f32 %v242, %v226
    %v251 = vmul.f32 %v243, %v227
    %v252 = vmul.f32 %v244, %v228
    %v253 = vmul.f32 %v245, %v229
    %v254 = vmul.f32 %v246, %v230
    %v255 = vmul.f32 %v247, %v231
    %v256 = vadd.f32 %v248, -3.5233877e-06
    %v257 = vadd.f32 %v249, -3.5233877e-06
    %v258 = vadd.f32 %v250, -3.5233877e-06
    %v259 = vadd.f32 %v251, -3.5233877e-06
    %v260 = vadd.f32 %v252, -3.5233877e-06
    %v261 = vadd.f32 %v253, -3.5233877e-06
    %v262 = vadd.f32 %v254, -3.5233877e-06
    %v263 = vadd.f32 %v255, -3.5233877e-06
    %v264 = vmul.f32 %v256, %v224
    %v265 = vmul.f32 %v257, %v225
    %v266 = vmul.f32 %v258, %v226
    %v267 = vmul.f32 %v259, %v227
    %v268 = vmul.f32 %v260, %v228
    %v269 = vmul.f32 %v261, %v229
    %v270 = vmul.f32 %v262, %v230
    %v271 = vmul.f32 %v263, %v231
    %v272 = vadd.f32 %v264, -4.3915065e-06
    %v273 = vadd.f32 %v265, -4.3915065e-06
    %v274 = vadd.f32 %v266, -4.3915065e-06
    %v275 = vadd.f32 %v267, -4.3915065e-06
    %v276 = vadd.f32 %v268, -4.3915065e-06
    %v277 = vadd.f32 %v269, -4.3915065e-06
    %v278 = vadd.f32 %v270, -4.3915065e-06
    %v279 = vadd.f32 %v271, -4.3915065e-06
    %v280 = vmul.f32 %v272, %v224
    %v281 = vmul.f32 %v273, %v225
    %v282 = vmul.f32 %v274, %v226
    %v283 = vmul.f32 %v275, %v227
    %v284 = vmul.f32 %v276, %v228
    %v285 = vmul.f32 %v277, %v229
    %v286 = vmul.f32 %v278, %v230
    %v287 = vmul.f32 %v279, %v231
    %v288 = vadd.f32 %v280, 0.00021858087
    %v289 = vadd.f32 %v281, 0.00021858087
    %v290 = vadd.f32 %v282, 0.00021858087
    %v291 = vadd.f32 %v283, 0.00021858087
    %v292 = vadd.f32 %v284, 0.00021858087
    %v293 = vadd.f32 %v285, 0.00021858087
    %v294 = vadd.f32 %v286, 0.00021858087
    %v295 = vadd.f32 %v287, 0.00021858087
    %v296 = vmul.f32 %v288, %v224
    %v297 = vmul.f32 %v289, %v225
    %v298 = vmul.f32 %v290, %v226
    %v299 = vmul.f32 %v291, %v227
    %v300 = vmul.f32 %v292, %v228
    %v301 = vmul.f32 %v293, %v229
    %v302 = vmul.f32 %v294, %v230
    %v303 = vmul.f32 %v295, %v231
    %v304 = vadd.f32 %v296, -0.001253725
    %v305 = vadd.f32 %v297, -0.001253725
    %v306 = vadd.f32 %v298, -0.001253725
    %v307 = vadd.f32 %v299, -0.001253725
    %v308 = vadd.f32 %v300, -0.001253725
    %v309 = vadd.f32 %v301, -0.001253725
    %v310 = vadd.f32 %v302, -0.001253725
    %v311 = vadd.f32 %v303, -0.001253725
    %v312 = vmul.f32 %v304, %v224
    %v313 = vmul.f32 %v305, %v225
    %v314 = vmul.f32 %v306, %v226
    %v315 = vmul.f32 %v307, %v227
    %v316 = vmul.f32 %v308, %v228
    %v317 = vmul.f32 %v309, %v229
    %v318 = vmul.f32 %v310, %v230
    %v319 = vmul.f32 %v311, %v231
    %v320 = vadd.f32 %v312, -0.0041776816
    %v321 = vadd.f32 %v313, -0.0041776816
    %v322 = vadd.f32 %v314, -0.0041776816
    %v323 = vadd.f32 %v315, -0.0041776816
    %v324 = vadd.f32 %v316, -0.0041776816
    %v325 = vadd.f32 %v317, -0.0041776816
    %v326 = vadd.f32 %v318, -0.0041776816
    %v327 = vadd.f32 %v319, -0.0041776816
    %v328 = vmul.f32 %v320, %v224
    %v329 = vmul.f32 %v321, %v225
    %v330 = vmul.f32 %v322, %v226
    %v331 = vmul.f32 %v323, %v227
    %v332 = vmul.f32 %v324, %v228
    %v333 = vmul.f32 %v325, %v229
    %v334 = vmul.f32 %v326, %v230
    %v335 = vmul.f32 %v327, %v231
    %v336 = vadd.f32 %v328, 0.24664073
    %v337 = vadd.f32 %v329, 0.24664073
    %v338 = vadd.f32 %v330, 0.24664073
    %v339 = vadd.f32 %v331, 0.24664073
    %v340 = vadd.f32 %v332, 0.24664073
    %v341 = vadd.f32 %v333, 0.24664073
    %v342 = vadd.f32 %v334, 0.24664073
    %v343 = vadd.f32 %v335, 0.24664073
    %v344 = vmul.f32 %v336, %v224
    %v345 = vmul.f32 %v337, %v225
    %v346 = vmul.f32 %v338, %v226
    %v347 = vmul.f32 %v339, %v227
    %v348 = vmul.f32 %v340, %v228
    %v349 = vmul.f32 %v341, %v229
    %v350 = vmul.f32 %v342, %v230
    %v351 = vmul.f32 %v343, %v231
    %v352 = vadd.f32 %v344, 1.5014094
    %v353 = vadd.f32 %v345, 1.5014094
    %v354 = vadd.f32 %v346, 1.5014094
    %v355 = vadd.f32 %v347, 1.5014094
    %v356 = vadd.f32 %v348, 1.5014094
    %v357 = vadd.f32 %v349, 1.5014094
    %v358 = vadd.f32 %v350, 1.5014094
    %v359 = vadd.f32 %v351, 1.5014094
    %v360 = vrsqrt.pop %v216
    %v361 = vmul.f32 %v360, %v216
    %v362 = vmul.f32 %v361, %v360
    %v363 = vmul.f32 0.5, %v362
    %v364 = vsub.f32 1.5, %v363
    %v365 = vmul.f32 %v360, %v364
    %v366 = vmul.f32 %v216, %v365
    %vm367 = vcmp.eq.f32.partialorder %v216, inf
    %v368 = vsel %vm367, %v216, %v366
    %vm369 = vcmp.eq.f32.partialorder %v216, 0.0
    %v370 = vand.u32 %v216, 2147483648
    %v371 = vsel %vm369, %v370, %v368
    %v372 = vrsqrt.pop %v217
    %v373 = vmul.f32 %v372, %v217
    %v374 = vmul.f32 %v373, %v372
    %v375 = vmul.f32 0.5, %v374
    %v376 = vsub.f32 1.5, %v375
    %v377 = vmul.f32 %v372, %v376
    %v378 = vmul.f32 %v217, %v377
    %vm379 = vcmp.eq.f32.partialorder %v217, inf
    %v380 = vsel %vm379, %v217, %v378
    %vm381 = vcmp.eq.f32.partialorder %v217, 0.0
    %v382 = vand.u32 %v217, 2147483648
    %v383 = vsel %vm381, %v382, %v380
    %v384 = vrsqrt.pop %v218
    %v385 = vmul.f32 %v384, %v218
    %v386 = vmul.f32 %v385, %v384
    %v387 = vmul.f32 0.5, %v386
    %v388 = vsub.f32 1.5, %v387
    %v389 = vmul.f32 %v384, %v388
    %v390 = vmul.f32 %v218, %v389
    %vm391 = vcmp.eq.f32.partialorder %v218, inf
    %v392 = vsel %vm391, %v218, %v390
    %vm393 = vcmp.eq.f32.partialorder %v218, 0.0
    %v394 = vand.u32 %v218, 2147483648
    %v395 = vsel %vm393, %v394, %v392
    %v396 = vrsqrt.pop %v219
    %v397 = vmul.f32 %v396, %v219
    %v398 = vmul.f32 %v397, %v396
    %v399 = vmul.f32 0.5, %v398
    %v400 = vsub.f32 1.5, %v399
    %v401 = vmul.f32 %v396, %v400
    %v402 = vmul.f32 %v219, %v401
    %vm403 = vcmp.eq.f32.partialorder %v219, inf
    %v404 = vsel %vm403, %v219, %v402
    %vm405 = vcmp.eq.f32.partialorder %v219, 0.0
    %v406 = vand.u32 %v219, 2147483648
    %v407 = vsel %vm405, %v406, %v404
    %v408 = vrsqrt.pop %v220
    %v409 = vmul.f32 %v408, %v220
    %v410 = vmul.f32 %v409, %v408
    %v411 = vmul.f32 0.5, %v410
    %v412 = vsub.f32 1.5, %v411
    %v413 = vmul.f32 %v408, %v412
    %v414 = vmul.f32 %v220, %v413
    %vm415 = vcmp.eq.f32.partialorder %v220, inf
    %v416 = vsel %vm415, %v220, %v414
    %vm417 = vcmp.eq.f32.partialorder %v220, 0.0
    %v418 = vand.u32 %v220, 2147483648
    %v419 = vsel %vm417, %v418, %v416
    %v420 = vrsqrt.pop %v221
    %v421 = vmul.f32 %v420, %v221
    %v422 = vmul.f32 %v421, %v420
    %v423 = vmul.f32 0.5, %v422
    %v424 = vsub.f32 1.5, %v423
    %v425 = vmul.f32 %v420, %v424
    %v426 = vmul.f32 %v221, %v425
    %vm427 = vcmp.eq.f32.partialorder %v221, inf
    %v428 = vsel %vm427, %v221, %v426
    %vm429 = vcmp.eq.f32.partialorder %v221, 0.0
    %v430 = vand.u32 %v221, 2147483648
    %v431 = vsel %vm429, %v430, %v428
    %v432 = vrsqrt.pop %v222
    %v433 = vmul.f32 %v432, %v222
    %v434 = vmul.f32 %v433, %v432
    %v435 = vmul.f32 0.5, %v434
    %v436 = vsub.f32 1.5, %v435
    %v437 = vmul.f32 %v432, %v436
    %v438 = vmul.f32 %v222, %v437
    %vm439 = vcmp.eq.f32.partialorder %v222, inf
    %v440 = vsel %vm439, %v222, %v438
    %vm441 = vcmp.eq.f32.partialorder %v222, 0.0
    %v442 = vand.u32 %v222, 2147483648
    %v443 = vsel %vm441, %v442, %v440
    %v444 = vrsqrt.pop %v223
    %v445 = vmul.f32 %v444, %v223
    %v446 = vmul.f32 %v445, %v444
    %v447 = vmul.f32 0.5, %v446
    %v448 = vsub.f32 1.5, %v447
    %v449 = vmul.f32 %v444, %v448
    %v450 = vmul.f32 %v223, %v449
    %vm451 = vcmp.eq.f32.partialorder %v223, inf
    %v452 = vsel %vm451, %v223, %v450
    %vm453 = vcmp.eq.f32.partialorder %v223, 0.0
    %v454 = vand.u32 %v223, 2147483648
    %v455 = vsel %vm453, %v454, %v452
    %v456 = vsub.f32 %v371, 3.0
    %v457 = vsub.f32 %v383, 3.0
    %v458 = vsub.f32 %v395, 3.0
    %v459 = vsub.f32 %v407, 3.0
    %v460 = vsub.f32 %v419, 3.0
    %v461 = vsub.f32 %v431, 3.0
    %v462 = vsub.f32 %v443, 3.0
    %v463 = vsub.f32 %v455, 3.0
    %v464 = vmul.f32 %v456, -0.00020021426
    %v465 = vmul.f32 %v457, -0.00020021426
    %v466 = vmul.f32 %v458, -0.00020021426
    %v467 = vmul.f32 %v459, -0.00020021426
    %v468 = vmul.f32 %v460, -0.00020021426
    %v469 = vmul.f32 %v461, -0.00020021426
    %v470 = vmul.f32 %v462, -0.00020021426
    %v471 = vmul.f32 %v463, -0.00020021426
    %v472 = vadd.f32 %v464, 0.00010095056
    %v473 = vadd.f32 %v465, 0.00010095056
    %v474 = vadd.f32 %v466, 0.00010095056
    %v475 = vadd.f32 %v467, 0.00010095056
    %v476 = vadd.f32 %v468, 0.00010095056
    %v477 = vadd.f32 %v469, 0.00010095056
    %v478 = vadd.f32 %v470, 0.00010095056
    %v479 = vadd.f32 %v471, 0.00010095056
    %v480 = vmul.f32 %v472, %v456
    %v481 = vmul.f32 %v473, %v457
    %v482 = vmul.f32 %v474, %v458
    %v483 = vmul.f32 %v475, %v459
    %v484 = vmul.f32 %v476, %v460
    %v485 = vmul.f32 %v477, %v461
    %v486 = vmul.f32 %v478, %v462
    %v487 = vmul.f32 %v479, %v463
    %v488 = vadd.f32 %v480, 0.0013493432
    %v489 = vadd.f32 %v481, 0.0013493432
    %v490 = vadd.f32 %v482, 0.0013493432
    %v491 = vadd.f32 %v483, 0.0013493432
    %v492 = vadd.f32 %v484, 0.0013493432
    %v493 = vadd.f32 %v485, 0.0013493432
    %v494 = vadd.f32 %v486, 0.0013493432
    %v495 = vadd.f32 %v487, 0.0013493432
    %v496 = vmul.f32 %v488, %v456
    %v497 = vmul.f32 %v489, %v457
    %v498 = vmul.f32 %v490, %v458
    %v499 = vmul.f32 %v491, %v459
    %v500 = vmul.f32 %v492, %v460
    %v501 = vmul.f32 %v493, %v461
    %v502 = vmul.f32 %v494, %v462
    %v503 = vmul.f32 %v495, %v463
    %v504 = vadd.f32 %v496, -0.0036734284
    %v505 = vadd.f32 %v497, -0.0036734284
    %v506 = vadd.f32 %v498, -0.0036734284
    %v507 = vadd.f32 %v499, -0.0036734284
    %v508 = vadd.f32 %v500, -0.0036734284
    %v509 = vadd.f32 %v501, -0.0036734284
    %v510 = vadd.f32 %v502, -0.0036734284
    %v511 = vadd.f32 %v503, -0.0036734284
    %v512 = vmul.f32 %v504, %v456
    %v513 = vmul.f32 %v505, %v457
    %v514 = vmul.f32 %v506, %v458
    %v515 = vmul.f32 %v507, %v459
    %v516 = vmul.f32 %v508, %v460
    %v517 = vmul.f32 %v509, %v461
    %v518 = vmul.f32 %v510, %v462
    %v519 = vmul.f32 %v511, %v463
    %v520 = vadd.f32 %v512, 0.0057395077
    %v521 = vadd.f32 %v513, 0.0057395077
    %v522 = vadd.f32 %v514, 0.0057395077
    %v523 = vadd.f32 %v515, 0.0057395077
    %v524 = vadd.f32 %v516, 0.0057395077
    %v525 = vadd.f32 %v517, 0.0057395077
    %v526 = vadd.f32 %v518, 0.0057395077
    %v527 = vadd.f32 %v519, 0.0057395077
    %v528 = vmul.f32 %v520, %v456
    %v529 = vmul.f32 %v521, %v457
    %v530 = vmul.f32 %v522, %v458
    %v531 = vmul.f32 %v523, %v459
    %v532 = vmul.f32 %v524, %v460
    %v533 = vmul.f32 %v525, %v461
    %v534 = vmul.f32 %v526, %v462
    %v535 = vmul.f32 %v527, %v463
    %v536 = vadd.f32 %v528, -0.0076224613
    %v537 = vadd.f32 %v529, -0.0076224613
    %v538 = vadd.f32 %v530, -0.0076224613
    %v539 = vadd.f32 %v531, -0.0076224613
    %v540 = vadd.f32 %v532, -0.0076224613
    %v541 = vadd.f32 %v533, -0.0076224613
    %v542 = vadd.f32 %v534, -0.0076224613
    %v543 = vadd.f32 %v535, -0.0076224613
    %v544 = vmul.f32 %v536, %v456
    %v545 = vmul.f32 %v537, %v457
    %v546 = vmul.f32 %v538, %v458
    %v547 = vmul.f32 %v539, %v459
    %v548 = vmul.f32 %v540, %v460
    %v549 = vmul.f32 %v541, %v461
    %v550 = vmul.f32 %v542, %v462
    %v551 = vmul.f32 %v543, %v463
    %v552 = vadd.f32 %v544, 0.0094388705
    %v553 = vadd.f32 %v545, 0.0094388705
    %v554 = vadd.f32 %v546, 0.0094388705
    %v555 = vadd.f32 %v547, 0.0094388705
    %v556 = vadd.f32 %v548, 0.0094388705
    %v557 = vadd.f32 %v549, 0.0094388705
    %v558 = vadd.f32 %v550, 0.0094388705
    %v559 = vadd.f32 %v551, 0.0094388705
    %v560 = vmul.f32 %v552, %v456
    %v561 = vmul.f32 %v553, %v457
    %v562 = vmul.f32 %v554, %v458
    %v563 = vmul.f32 %v555, %v459
    %v564 = vmul.f32 %v556, %v460
    %v565 = vmul.f32 %v557, %v461
    %v566 = vmul.f32 %v558, %v462
    %v567 = vmul.f32 %v559, %v463
    %v568 = vadd.f32 %v560, 1.001674
    %v569 = vadd.f32 %v561, 1.001674
    %v570 = vadd.f32 %v562, 1.001674
    %v571 = vadd.f32 %v563, 1.001674
    %v572 = vadd.f32 %v564, 1.001674
    %v573 = vadd.f32 %v565, 1.001674
    %v574 = vadd.f32 %v566, 1.001674
    %v575 = vadd.f32 %v567, 1.001674
    %v576 = vmul.f32 %v568, %v456
    %v577 = vmul.f32 %v569, %v457
    %v578 = vmul.f32 %v570, %v458
    %v579 = vmul.f32 %v571, %v459
    %v580 = vmul.f32 %v572, %v460
    %v581 = vmul.f32 %v573, %v461
    %v582 = vmul.f32 %v574, %v462
    %v583 = vmul.f32 %v575, %v463
    %v584 = vadd.f32 %v576, 2.8329768
    %v585 = vadd.f32 %v577, 2.8329768
    %v586 = vadd.f32 %v578, 2.8329768
    %v587 = vadd.f32 %v579, 2.8329768
    %v588 = vadd.f32 %v580, 2.8329768
    %v589 = vadd.f32 %v581, 2.8329768
    %v590 = vadd.f32 %v582, 2.8329768
    %v591 = vadd.f32 %v583, 2.8329768
    %vm592 = vcmp.lt.f32.partialorder %v216, 5.0
    %vm593 = vcmp.lt.f32.partialorder %v217, 5.0
    %vm594 = vcmp.lt.f32.partialorder %v218, 5.0
    %vm595 = vcmp.lt.f32.partialorder %v219, 5.0
    %vm596 = vcmp.lt.f32.partialorder %v220, 5.0
    %vm597 = vcmp.lt.f32.partialorder %v221, 5.0
    %vm598 = vcmp.lt.f32.partialorder %v222, 5.0
    %vm599 = vcmp.lt.f32.partialorder %v223, 5.0
    %v600 = vsel %vm592, %v352, %v584
    %v601 = vsel %vm593, %v353, %v585
    %v602 = vsel %vm594, %v354, %v586
    %v603 = vsel %vm595, %v355, %v587
    %v604 = vsel %vm596, %v356, %v588
    %v605 = vsel %vm597, %v357, %v589
    %v606 = vsel %vm598, %v358, %v590
    %v607 = vsel %vm599, %v359, %v591
    %v608 = vmul.f32 %v600, 1.4142135
    %v609 = vmul.f32 %v601, 1.4142135
    %v610 = vmul.f32 %v602, 1.4142135
    %v611 = vmul.f32 %v603, 1.4142135
    %v612 = vmul.f32 %v604, 1.4142135
    %v613 = vmul.f32 %v605, 1.4142135
    %v614 = vmul.f32 %v606, 1.4142135
    %v615 = vmul.f32 %v607, 1.4142135
    %v616 = vmul.f32 %v608, %v168
    %v617 = vmul.f32 %v609, %v169
    %v618 = vmul.f32 %v610, %v170
    %v619 = vmul.f32 %v611, %v171
    %v620 = vmul.f32 %v612, %v172
    %v621 = vmul.f32 %v613, %v173
    %v622 = vmul.f32 %v614, %v174
    %v623 = vmul.f32 %v615, %v175
    %s624 = sld [smem:[#allocation3]]
    %v625 = vld [vmem:[#allocation4] sm:$0xff]
    %v626 = vld [vmem:[#allocation4 + $0x8] sm:$0xff]
    %v627 = vld [vmem:[#allocation4 + $0x10] sm:$0xff]
    %v628 = vld [vmem:[#allocation4 + $0x18] sm:$0xff]
    %v629 = vld [vmem:[#allocation4 + $0x20] sm:$0xff]
    %v630 = vld [vmem:[#allocation4 + $0x28] sm:$0xff]
    %v631 = vld [vmem:[#allocation4 + $0x30] sm:$0xff]
    %v632 = vld [vmem:[#allocation4 + $0x38] sm:$0xff]
    %v633 = vstv %s624
    %v634 = vmul.f32 %v633, %v616
    %v635 = vmul.f32 %v633, %v617
    %v636 = vmul.f32 %v633, %v618
    %v637 = vmul.f32 %v633, %v619
    %v638 = vmul.f32 %v633, %v620
    %v639 = vmul.f32 %v633, %v621
    %v640 = vmul.f32 %v633, %v622
    %v641 = vmul.f32 %v633, %v623
    %v642 = vadd.f32 %v625, %v634
    %v643 = vadd.f32 %v626, %v635
    %v644 = vadd.f32 %v627, %v636
    %v645 = vadd.f32 %v628, %v637
    %v646 = vadd.f32 %v629, %v638
    %v647 = vadd.f32 %v630, %v639
    %v648 = vadd.f32 %v631, %v640
    %v649 = vadd.f32 %v632, %v641
    %650 = vst [vmem:[#allocation7] sm:$0xff] %v642
    %651 = vst [vmem:[#allocation7 + $0x8] sm:$0xff] %v643
    %652 = vst [vmem:[#allocation7 + $0x10] sm:$0xff] %v644
    %653 = vst [vmem:[#allocation7 + $0x18] sm:$0xff] %v645
    %654 = vst [vmem:[#allocation7 + $0x20] sm:$0xff] %v646
    %655 = vst [vmem:[#allocation7 + $0x28] sm:$0xff] %v647
    %656 = vst [vmem:[#allocation7 + $0x30] sm:$0xff] %v648
    %657 = vst [vmem:[#allocation7 + $0x38] sm:$0xff] %v649
    // Predicated region
    $region18: #{tpu_custom_call.1} parent=1 // pred_check
      _
    $region19: #{tpu_custom_call.1} parent=1 // pred_check_branch
      %659 = sbr.rel (0) target = $region21
    $region20: #{tpu_custom_call.1} parent=1 // pred_region
      %661 = vsyncadd [#allocation6], 0
      %s663 = sshll.u32 [#allocation7], 4
      %s664 = int_to_ptr.vmem [resolvable:$true] %s663
      %s665 = sshll.u32 %s3, 4
      %s666 = int_to_ptr.hbm [resolvable:$true] %s665
      %668 = dma.vmem_to_hbm [thread:$0]  %s664, 1024, %s666, [#allocation6]
    $region21: #{tpu_custom_call.1} parent=1 // pred_fallthru
      _
    // Predicated region
    $region22: #{tpu_custom_call.1} parent=1 // pred_check
      _
    $region23: #{tpu_custom_call.1} parent=1 // pred_check_branch
      %670 = sbr.rel (0) target = $region25
    $region24: #{tpu_custom_call.1} parent=1 // pred_region
      %672 = dma.done [#allocation6], 1024
    $region25: #{tpu_custom_call.1} parent=1 // pred_fallthru
      _
    %673 = vsyncpa [#allocation5], 1
    %674 = vsyncpa [#allocation6], 1

</llo_original>
